<compile_context>
chip_gen: v5e
topology: v5e:2x2
jax: 0.10.0
libtpu: 0.0.40
codegen_flags: <defaults>
</compile_context>

<pallas_src>
import jax
import jax.numpy as jnp
from jax.experimental import pallas as pl
from jax.experimental.pallas import tpu as pltpu

NUM_CLASSES = 10     # stand-in for len(label_dict_from_config_file('hand_gesture.yaml'))
BN_EPS = 1e-5
PAD_FEATURES = 64    # 63 -> 64 (aligned K for the first MXU pass)
PAD_CLASSES = 128    # 10 -> 128 (lane-dense output stores)
TB_MAX = 1024        # max batch-tile rows (sized for v7x's smaller VMEM)


def _round_up(n, m):
    return ((n + m - 1) // m) * m


def mlp_kernel(x_ref,
               w1_ref, b1_ref,
               w2_ref, b2_ref,
               w3_ref, b3_ref,
               w4_ref, b4_ref,
               w5_ref, b5_ref,
               o_ref):
    # Activations / bias adds / ReLU in f32; MXU fed bf16 operands, f32 accum.
    x = x_ref[...]                                                 # (TB, 64) f32

    # Linear(63->128) (feature dim padded to 64 with a zero row in W1) + ReLU
    h = jnp.dot(x.astype(jnp.bfloat16), w1_ref[...],
                preferred_element_type=jnp.float32) + b1_ref[...]
    h = jnp.maximum(h, 0.0)

    # Linear(128,128) with eval-mode BatchNorm folded in (+ ReLU; Dropout = id)
    h = jnp.dot(h.astype(jnp.bfloat16), w2_ref[...],
                preferred_element_type=jnp.float32) + b2_ref[...]
    h = jnp.maximum(h, 0.0)

    # Linear(128,128) + ReLU (+ Dropout p=0.4, identity in eval)
    h = jnp.dot(h.astype(jnp.bfloat16), w3_ref[...],
                preferred_element_type=jnp.float32) + b3_ref[...]
    h = jnp.maximum(h, 0.0)

    # Linear(128,128) + ReLU (+ Dropout p=0.6, identity in eval)
    h = jnp.dot(h.astype(jnp.bfloat16), w4_ref[...],
                preferred_element_type=jnp.float32) + b4_ref[...]
    h = jnp.maximum(h, 0.0)

    # Final Linear(128, NUM_CLASSES), class dim zero-padded to 128 lanes
    o_ref[...] = jnp.dot(h.astype(jnp.bfloat16), w5_ref[...],
                         preferred_element_type=jnp.float32) + b5_ref[...]


def prepare_kernel_params(params):
    """One-time weight transform: pad dims, fold BN, cast weights to bf16."""
    (w1, b1, gamma, beta, mean, var, w2, b2, w3, b3, w4, b4, w5, b5) = params

    # Pad input-feature dim 63 -> 64 with a zero row (matches zero-padded x col).
    w1p = jnp.pad(w1, ((0, PAD_FEATURES - w1.shape[0]), (0, 0)))

    # Fold eval-mode BatchNorm (applied after ReLU of layer 1) into layer 2:
    #   BN(a) @ W2 + b2 = a @ (scale[:,None]*W2) + (shift @ W2 + b2)
    scale = gamma * jax.lax.rsqrt(var + BN_EPS)        # (1, 128)
    shift = beta - mean * scale                        # (1, 128)
    w2f = scale.reshape(-1, 1) * w2                    # (128, 128)
    b2f = shift @ w2 + b2                              # (1, 128)

    # Pad class dim 10 -> 128 with zero columns (lane-dense output).
    w5p = jnp.pad(w5, ((0, 0), (0, PAD_CLASSES - w5.shape[1])))
    b5p = jnp.pad(b5, ((0, 0), (0, PAD_CLASSES - b5.shape[1])))

    bf16 = lambda w: w.astype(jnp.bfloat16)
    return (bf16(w1p), b1.astype(jnp.float32),
            bf16(w2f), b2f.astype(jnp.float32),
            bf16(w3), b3.astype(jnp.float32),
            bf16(w4), b4.astype(jnp.float32),
            bf16(w5p), b5p.astype(jnp.float32))


def neural_network_forward(x, params):
    """x: (B, 21, 3) float32 (or any (B, *) flattening to 63 features)."""
    B = x.shape[0]
    x_flat = x.reshape(B, -1).astype(jnp.float32)      # nn.Flatten()
    assert x_flat.shape[1] == 63
    x_pad = jnp.pad(x_flat, ((0, 0), (0, PAD_FEATURES - 63)))

    kparams = prepare_kernel_params(params)

    # Batch tile: small batches -> single step; big batches -> streamed tiles.
    TB = min(TB_MAX, _round_up(B, 8))
    B_pad = _round_up(B, TB)
    if B_pad != B:
        x_pad = jnp.pad(x_pad, ((0, B_pad - B), (0, 0)))

    grid = (B_pad // TB,)
    const2d = lambda i: (0, 0)                          # weights stay resident
    weight_specs = [pl.BlockSpec(p.shape, const2d) for p in kparams]

    out = pl.pallas_call(
        mlp_kernel,
        out_shape=jax.ShapeDtypeStruct((B_pad, PAD_CLASSES), jnp.float32),
        grid=grid,
        in_specs=[pl.BlockSpec((TB, PAD_FEATURES), lambda i: (i, 0))] + weight_specs,
        out_specs=pl.BlockSpec((TB, PAD_CLASSES), lambda i: (i, 0)),
        compiler_params=pltpu.CompilerParams(
            dimension_semantics=("parallel",)),         # shard batch tiles on v7x's 2 TCs
    )(x_pad, *kparams)

    return out[:B, :NUM_CLASSES]


def reference_forward(x, params):
    """Pure-JAX f32 reference (eval mode), for a loose numerical check."""
    (w1, b1, gamma, beta, mean, var, w2, b2, w3, b3, w4, b4, w5, b5) = params
    h = x.reshape(x.shape[0], -1).astype(jnp.float32)
    h = jnp.maximum(h @ w1 + b1, 0.0)
    scale = gamma * jax.lax.rsqrt(var + BN_EPS)
    shift = beta - mean * scale
    h = h * scale + shift
    h = jnp.maximum(h @ w2 + b2, 0.0)
    h = jnp.maximum(h @ w3 + b3, 0.0)
    h = jnp.maximum(h @ w4 + b4, 0.0)
    return h @ w5 + b5


def init_params(key):
    """Deterministic init mimicking PyTorch nn.Linear defaults (U(-1/sqrt(fan_in), +))."""
    def linear(k, fan_in, fan_out):
        k_w, k_b = jax.random.split(k)
        bound = 1.0 / jnp.sqrt(fan_in)
        w = jax.random.uniform(k_w, (fan_in, fan_out), jnp.float32, -bound, bound)
        b = jax.random.uniform(k_b, (1, fan_out), jnp.float32, -bound, bound)
        return w, b

    keys = jax.random.split(key, 6)
    w1, b1 = linear(keys[0], 63, 128)
    w2, b2 = linear(keys[1], 128, 128)
    w3, b3 = linear(keys[2], 128, 128)
    w4, b4 = linear(keys[3], 128, 128)
    w5, b5 = linear(keys[4], 128, NUM_CLASSES)

    # BatchNorm1d(128) eval stats, perturbed so the BN fold is actually exercised.
    k_bn = keys[5]
    gamma = jnp.ones((1, 128), jnp.float32) + 0.1 * jax.random.normal(k_bn, (1, 128))
    beta = jnp.zeros((1, 128), jnp.float32) + 0.05
    mean = 0.01 * jnp.ones((1, 128), jnp.float32)
    var = jnp.ones((1, 128), jnp.float32)

    return (w1, b1, gamma, beta, mean, var, w2, b2, w3, b3, w4, b4, w5, b5)


if __name__ == "__main__":
    key = jax.random.PRNGKey(0)
    k_x, k_p = jax.random.split(key)

    # 21 hand landmarks x 3 coords = 63 features, batch of 8.
    x = jax.random.normal(k_x, (8, 21, 3), jnp.float32)
    params = init_params(k_p)

    logits = neural_network_forward(x, params)
    jax.block_until_ready(logits)

    assert logits.shape == (8, NUM_CLASSES)
    assert bool(jnp.all(jnp.isfinite(logits)))

    # Loose check vs f32 reference (kernel uses bf16 weights -> small drift).
    ref = reference_forward(x, params)
    assert bool(jnp.allclose(logits, ref, rtol=0.1, atol=0.1)), \
        f"max abs diff {float(jnp.max(jnp.abs(logits - ref)))}"

    print("KERNEL_OK")
</pallas_src>

<mosaic_0001>
module attributes {stable_mosaic.version = 11 : i64} {
  func.func @mlp_kernel(%arg0: i32, %arg1: memref<8x64xf32, #tpu.memory_space<vmem>>, %arg2: memref<64x128xbf16, #tpu.memory_space<vmem>>, %arg3: memref<1x128xf32, #tpu.memory_space<vmem>>, %arg4: memref<128x128xbf16, #tpu.memory_space<vmem>>, %arg5: memref<1x128xf32, #tpu.memory_space<vmem>>, %arg6: memref<128x128xbf16, #tpu.memory_space<vmem>>, %arg7: memref<1x128xf32, #tpu.memory_space<vmem>>, %arg8: memref<128x128xbf16, #tpu.memory_space<vmem>>, %arg9: memref<1x128xf32, #tpu.memory_space<vmem>>, %arg10: memref<128x128xbf16, #tpu.memory_space<vmem>>, %arg11: memref<1x128xf32, #tpu.memory_space<vmem>>, %arg12: memref<8x128xf32, #tpu.memory_space<vmem>>) attributes {dimension_semantics = [#tpu.dimension_semantics<parallel>], iteration_bounds = array<i64: 1>, scalar_prefetch = 0 : i64, scratch_operands = 0 : i64, tpu.core_type = #tpu.core_type<tc>, window_params = [{transform_indices = @transform_0, window_bounds = array<i64: 8, 64>}, {pipeline_mode = #tpu.pipeline_mode<synchronous>, transform_indices = @transform_1, window_bounds = array<i64: 64, 128>}, {pipeline_mode = #tpu.pipeline_mode<synchronous>, transform_indices = @transform_2, window_bounds = array<i64: 1, 128>}, {pipeline_mode = #tpu.pipeline_mode<synchronous>, transform_indices = @transform_3, window_bounds = array<i64: 128, 128>}, {pipeline_mode = #tpu.pipeline_mode<synchronous>, transform_indices = @transform_4, window_bounds = array<i64: 1, 128>}, {pipeline_mode = #tpu.pipeline_mode<synchronous>, transform_indices = @transform_5, window_bounds = array<i64: 128, 128>}, {pipeline_mode = #tpu.pipeline_mode<synchronous>, transform_indices = @transform_6, window_bounds = array<i64: 1, 128>}, {pipeline_mode = #tpu.pipeline_mode<synchronous>, transform_indices = @transform_7, window_bounds = array<i64: 128, 128>}, {pipeline_mode = #tpu.pipeline_mode<synchronous>, transform_indices = @transform_8, window_bounds = array<i64: 1, 128>}, {pipeline_mode = #tpu.pipeline_mode<synchronous>, transform_indices = @transform_9, window_bounds = array<i64: 128, 128>}, {pipeline_mode = #tpu.pipeline_mode<synchronous>, transform_indices = @transform_10, window_bounds = array<i64: 1, 128>}, {transform_indices = @transform_11, window_bounds = array<i64: 8, 128>}]} {
    %c0 = arith.constant 0 : index
    %c0_0 = arith.constant 0 : index
    %0 = vector.load %arg1[%c0, %c0_0] : memref<8x64xf32, #tpu.memory_space<vmem>>, vector<8x64xf32>
    %1 = arith.truncf %0 : vector<8x64xf32> to vector<8x64xbf16>
    %c0_1 = arith.constant 0 : index
    %c0_2 = arith.constant 0 : index
    %2 = vector.load %arg2[%c0_1, %c0_2] : memref<64x128xbf16, #tpu.memory_space<vmem>>, vector<64x128xbf16>
    %cst = arith.constant dense<0.000000e+00> : vector<8x128xf32>
    %3 = tpu.matmul %1, %2, %cst {dimension_numbers = #tpu.dot_dimension_numbers<[1], [0], [0], [1], [0, 0, 1, 1], [], []>} : vector<8x64xbf16>, vector<64x128xbf16>, vector<8x128xf32> -> vector<8x128xf32>
    %c0_3 = arith.constant 0 : index
    %c0_4 = arith.constant 0 : index
    %4 = vector.load %arg3[%c0_3, %c0_4] : memref<1x128xf32, #tpu.memory_space<vmem>>, vector<1x128xf32>
    %5 = vector.broadcast %4 : vector<1x128xf32> to vector<8x128xf32>
    %6 = arith.addf %3, %5 : vector<8x128xf32>
    %cst_5 = arith.constant 0.000000e+00 : f32
    %7 = vector.broadcast %cst_5 : f32 to vector<8x128xf32>
    %8 = arith.maximumf %6, %7 : vector<8x128xf32>
    %9 = arith.truncf %8 : vector<8x128xf32> to vector<8x128xbf16>
    %c0_6 = arith.constant 0 : index
    %c0_7 = arith.constant 0 : index
    %10 = vector.load %arg4[%c0_6, %c0_7] : memref<128x128xbf16, #tpu.memory_space<vmem>>, vector<128x128xbf16>
    %cst_8 = arith.constant dense<0.000000e+00> : vector<8x128xf32>
    %11 = tpu.matmul %9, %10, %cst_8 {dimension_numbers = #tpu.dot_dimension_numbers<[1], [0], [0], [1], [0, 0, 1, 1], [], []>} : vector<8x128xbf16>, vector<128x128xbf16>, vector<8x128xf32> -> vector<8x128xf32>
    %c0_9 = arith.constant 0 : index
    %c0_10 = arith.constant 0 : index
    %12 = vector.load %arg5[%c0_9, %c0_10] : memref<1x128xf32, #tpu.memory_space<vmem>>, vector<1x128xf32>
    %13 = vector.broadcast %12 : vector<1x128xf32> to vector<8x128xf32>
    %14 = arith.addf %11, %13 : vector<8x128xf32>
    %cst_11 = arith.constant 0.000000e+00 : f32
    %15 = vector.broadcast %cst_11 : f32 to vector<8x128xf32>
    %16 = arith.maximumf %14, %15 : vector<8x128xf32>
    %17 = arith.truncf %16 : vector<8x128xf32> to vector<8x128xbf16>
    %c0_12 = arith.constant 0 : index
    %c0_13 = arith.constant 0 : index
    %18 = vector.load %arg6[%c0_12, %c0_13] : memref<128x128xbf16, #tpu.memory_space<vmem>>, vector<128x128xbf16>
    %cst_14 = arith.constant dense<0.000000e+00> : vector<8x128xf32>
    %19 = tpu.matmul %17, %18, %cst_14 {dimension_numbers = #tpu.dot_dimension_numbers<[1], [0], [0], [1], [0, 0, 1, 1], [], []>} : vector<8x128xbf16>, vector<128x128xbf16>, vector<8x128xf32> -> vector<8x128xf32>
    %c0_15 = arith.constant 0 : index
    %c0_16 = arith.constant 0 : index
    %20 = vector.load %arg7[%c0_15, %c0_16] : memref<1x128xf32, #tpu.memory_space<vmem>>, vector<1x128xf32>
    %21 = vector.broadcast %20 : vector<1x128xf32> to vector<8x128xf32>
    %22 = arith.addf %19, %21 : vector<8x128xf32>
    %cst_17 = arith.constant 0.000000e+00 : f32
    %23 = vector.broadcast %cst_17 : f32 to vector<8x128xf32>
    %24 = arith.maximumf %22, %23 : vector<8x128xf32>
    %25 = arith.truncf %24 : vector<8x128xf32> to vector<8x128xbf16>
    %c0_18 = arith.constant 0 : index
    %c0_19 = arith.constant 0 : index
    %26 = vector.load %arg8[%c0_18, %c0_19] : memref<128x128xbf16, #tpu.memory_space<vmem>>, vector<128x128xbf16>
    %cst_20 = arith.constant dense<0.000000e+00> : vector<8x128xf32>
    %27 = tpu.matmul %25, %26, %cst_20 {dimension_numbers = #tpu.dot_dimension_numbers<[1], [0], [0], [1], [0, 0, 1, 1], [], []>} : vector<8x128xbf16>, vector<128x128xbf16>, vector<8x128xf32> -> vector<8x128xf32>
    %c0_21 = arith.constant 0 : index
    %c0_22 = arith.constant 0 : index
    %28 = vector.load %arg9[%c0_21, %c0_22] : memref<1x128xf32, #tpu.memory_space<vmem>>, vector<1x128xf32>
    %29 = vector.broadcast %28 : vector<1x128xf32> to vector<8x128xf32>
    %30 = arith.addf %27, %29 : vector<8x128xf32>
    %cst_23 = arith.constant 0.000000e+00 : f32
    %31 = vector.broadcast %cst_23 : f32 to vector<8x128xf32>
    %32 = arith.maximumf %30, %31 : vector<8x128xf32>
    %33 = arith.truncf %32 : vector<8x128xf32> to vector<8x128xbf16>
    %c0_24 = arith.constant 0 : index
    %c0_25 = arith.constant 0 : index
    %34 = vector.load %arg10[%c0_24, %c0_25] : memref<128x128xbf16, #tpu.memory_space<vmem>>, vector<128x128xbf16>
    %cst_26 = arith.constant dense<0.000000e+00> : vector<8x128xf32>
    %35 = tpu.matmul %33, %34, %cst_26 {dimension_numbers = #tpu.dot_dimension_numbers<[1], [0], [0], [1], [0, 0, 1, 1], [], []>} : vector<8x128xbf16>, vector<128x128xbf16>, vector<8x128xf32> -> vector<8x128xf32>
    %c0_27 = arith.constant 0 : index
    %c0_28 = arith.constant 0 : index
    %36 = vector.load %arg11[%c0_27, %c0_28] : memref<1x128xf32, #tpu.memory_space<vmem>>, vector<1x128xf32>
    %37 = vector.broadcast %36 : vector<1x128xf32> to vector<8x128xf32>
    %38 = arith.addf %35, %37 : vector<8x128xf32>
    %c0_29 = arith.constant 0 : index
    %c0_30 = arith.constant 0 : index
    %39 = vector.load %arg12[%c0_29, %c0_30] : memref<8x128xf32, #tpu.memory_space<vmem>>, vector<8x128xf32>
    tpu.vector_store %arg12[%c0_29, %c0_30], %38 {strides = array<i32>} : memref<8x128xf32, #tpu.memory_space<vmem>>, vector<8x128xf32>,
    return
  }
  func.func @transform_0(%arg0: i32) -> (i32, i32) {
    %c0_i32 = arith.constant 0 : i32
    %c0_i32_0 = arith.constant 0 : i32
    return %arg0, %c0_i32 : i32, i32
  }
  func.func @transform_1(%arg0: i32) -> (i32, i32) {
    %c0_i32 = arith.constant 0 : i32
    %c0_i32_0 = arith.constant 0 : i32
    %c0_i32_1 = arith.constant 0 : i32
    return %c0_i32, %c0_i32_0 : i32, i32
  }
  func.func @transform_2(%arg0: i32) -> (i32, i32) {
    %c0_i32 = arith.constant 0 : i32
    %c0_i32_0 = arith.constant 0 : i32
    %c0_i32_1 = arith.constant 0 : i32
    return %c0_i32, %c0_i32_0 : i32, i32
  }
  func.func @transform_3(%arg0: i32) -> (i32, i32) {
    %c0_i32 = arith.constant 0 : i32
    %c0_i32_0 = arith.constant 0 : i32
    %c0_i32_1 = arith.constant 0 : i32
    return %c0_i32, %c0_i32_0 : i32, i32
  }
  func.func @transform_4(%arg0: i32) -> (i32, i32) {
    %c0_i32 = arith.constant 0 : i32
    %c0_i32_0 = arith.constant 0 : i32
    %c0_i32_1 = arith.constant 0 : i32
    return %c0_i32, %c0_i32_0 : i32, i32
  }
  func.func @transform_5(%arg0: i32) -> (i32, i32) {
    %c0_i32 = arith.constant 0 : i32
    %c0_i32_0 = arith.constant 0 : i32
    %c0_i32_1 = arith.constant 0 : i32
    return %c0_i32, %c0_i32_0 : i32, i32
  }
  func.func @transform_6(%arg0: i32) -> (i32, i32) {
    %c0_i32 = arith.constant 0 : i32
    %c0_i32_0 = arith.constant 0 : i32
    %c0_i32_1 = arith.constant 0 : i32
    return %c0_i32, %c0_i32_0 : i32, i32
  }
  func.func @transform_7(%arg0: i32) -> (i32, i32) {
    %c0_i32 = arith.constant 0 : i32
    %c0_i32_0 = arith.constant 0 : i32
    %c0_i32_1 = arith.constant 0 : i32
    return %c0_i32, %c0_i32_0 : i32, i32
  }
  func.func @transform_8(%arg0: i32) -> (i32, i32) {
    %c0_i32 = arith.constant 0 : i32
    %c0_i32_0 = arith.constant 0 : i32
    %c0_i32_1 = arith.constant 0 : i32
    return %c0_i32, %c0_i32_0 : i32, i32
  }
  func.func @transform_9(%arg0: i32) -> (i32, i32) {
    %c0_i32 = arith.constant 0 : i32
    %c0_i32_0 = arith.constant 0 : i32
    %c0_i32_1 = arith.constant 0 : i32
    return %c0_i32, %c0_i32_0 : i32, i32
  }
  func.func @transform_10(%arg0: i32) -> (i32, i32) {
    %c0_i32 = arith.constant 0 : i32
    %c0_i32_0 = arith.constant 0 : i32
    %c0_i32_1 = arith.constant 0 : i32
    return %c0_i32, %c0_i32_0 : i32, i32
  }
  func.func @transform_11(%arg0: i32) -> (i32, i32) {
    %c0_i32 = arith.constant 0 : i32
    %c0_i32_0 = arith.constant 0 : i32
    return %arg0, %c0_i32 : i32, i32
  }
}

</mosaic_0001>

<llo_original>
// kernel: tpu_custom_call.1
$region0: #{tpu_custom_call.1}
  #allocation0 [shape = 'u32[]', space=smem, size = 0x4, offset = 0x4, fixed_abs, tag = 'smem constant byte address 0x4 - core index']
  #allocation1 [shape = 'u32[72,128]{1,0:T(1,128)}', space=vmem, size = 0x9000, scoped, tag = 'internal scratch']
  %s0 = inlined_call_operand.hbm [shape: f32[8,64], index: 0, kind: input, shape index: {}]
  %s1 = inlined_call_operand.hbm [shape: bf16[64,128], index: 1, kind: input, shape index: {}]
  %s2 = inlined_call_operand.vmem [shape: f32[1,128], index: 2, kind: input, shape index: {}]
  %s3 = inlined_call_operand.hbm [shape: bf16[128,128], index: 3, kind: input, shape index: {}]
  %s4 = inlined_call_operand.vmem [shape: f32[1,128], index: 4, kind: input, shape index: {}]
  %s5 = inlined_call_operand.hbm [shape: bf16[128,128], index: 5, kind: input, shape index: {}]
  %s6 = inlined_call_operand.vmem [shape: f32[1,128], index: 6, kind: input, shape index: {}]
  %s7 = inlined_call_operand.hbm [shape: bf16[128,128], index: 7, kind: input, shape index: {}]
  %s8 = inlined_call_operand.vmem [shape: f32[1,128], index: 8, kind: input, shape index: {}]
  %s9 = inlined_call_operand.hbm [shape: bf16[128,128], index: 9, kind: input, shape index: {}]
  %s10 = inlined_call_operand.vmem [shape: f32[1,128], index: 10, kind: input, shape index: {}]
  %s11 = inlined_call_operand.hbm [shape: f32[8,128], index: 11, kind: output, shape index: {}]
  %s12 = sld [smem:[#allocation0]]
  $region78: #{tpu_custom_call.1} parent=0
    _
  %s14 = ssub.s32 1, %s12
  %s15 = scalar_select 0, %s14, %s12
  $region1: #{tpu_custom_call.1} parent=0
    #allocation2 [shape = 'u8[4096]{0}', space=vmem, size = 0x1000, scoped, tag = 'input window, operand 0, single buffered']
    #allocation3 [shape = 's32[1]{0}', space=sflag, size = 0x4, scoped, tag = 'scoped memory for tpu_custom_call.1']
    #allocation4 [shape = 's32[1]{0}', space=sflag, size = 0x4, scoped, tag = 'scoped memory for tpu_custom_call.1']
    #allocation5 [shape = 'u8[16384]{0}', space=vmem, size = 0x4000, scoped, tag = 'input window, operand 1, single buffered']
    #allocation6 [shape = 's32[1]{0}', space=sflag, size = 0x4, scoped, tag = 'scoped memory for tpu_custom_call.1']
    #allocation7 [shape = 'u8[32768]{0}', space=vmem, size = 0x8000, scoped, tag = 'input window, operand 3, single buffered']
    #allocation8 [shape = 'u8[32768]{0}', space=vmem, size = 0x8000, scoped, tag = 'input window, operand 5, single buffered']
    #allocation9 [shape = 's32[1]{0}', space=sflag, size = 0x4, scoped, tag = 'scoped memory for tpu_custom_call.1']
    #allocation10 [shape = 'u8[32768]{0}', space=vmem, size = 0x8000, scoped, tag = 'input window, operand 7, single buffered']
    #allocation11 [shape = 'u8[32768]{0}', space=vmem, size = 0x8000, scoped, tag = 'input window, operand 9, single buffered']
    #allocation12 [shape = 's32[1]{0}', space=sflag, size = 0x4, scoped, tag = 'scoped memory for tpu_custom_call.1']
    #allocation13 [shape = 'u8[4096]{0}', space=vmem, size = 0x1000, scoped, tag = 'output window, operand 0, single buffered']
    %16 = vsyncpa [#allocation3], 0
    %17 = vsyncpa [#allocation6], 0
    %18 = vsyncpa [#allocation9], 0
    %19 = vsyncpa [#allocation12], 0
    %20 = vsyncpa [#allocation4], 0
    // Predicated region
    $region2: #{tpu_custom_call.1} parent=1 // pred_check
      _
    $region3: #{tpu_custom_call.1} parent=1 // pred_check_branch
      %22 = sbr.rel (0) target = $region5
    $region4: #{tpu_custom_call.1} parent=1 // pred_region
      %24 = vsyncadd [#allocation3], 0
      %s26 = sshll.u32 %s0, 4
      %s27 = int_to_ptr.hbm [resolvable:$true] %s26
      %s28 = sshll.u32 [#allocation2], 4
      %s29 = int_to_ptr.vmem [resolvable:$true] %s28
      %31 = dma.hbm_to_vmem [thread:$0]  %s27, 128, %s29, [#allocation3]
    $region5: #{tpu_custom_call.1} parent=1 // pred_fallthru
      _
    // Predicated region
    $region6: #{tpu_custom_call.1} parent=1 // pred_check
      _
    $region7: #{tpu_custom_call.1} parent=1 // pred_check_branch
      %33 = sbr.rel (0) target = $region9
    $region8: #{tpu_custom_call.1} parent=1 // pred_region
      %35 = vsyncadd [#allocation6], 0
      %s36 = sshll.u32 %s1, 4
      %s37 = int_to_ptr.hbm [resolvable:$true] %s36
      %s38 = sshll.u32 [#allocation5], 4
      %s39 = int_to_ptr.vmem [resolvable:$true] %s38
      %44 = dma.hbm_to_vmem [thread:$0]  %s37, 512, %s39, [#allocation6], 64, 64, 4
    $region9: #{tpu_custom_call.1} parent=1 // pred_fallthru
      _
    // Predicated region
    $region10: #{tpu_custom_call.1} parent=1 // pred_check
      _
    $region11: #{tpu_custom_call.1} parent=1 // pred_check_branch
      %46 = sbr.rel (0) target = $region13
    $region12: #{tpu_custom_call.1} parent=1 // pred_region
      _
    $region13: #{tpu_custom_call.1} parent=1 // pred_fallthru
      _
    // Predicated region
    $region14: #{tpu_custom_call.1} parent=1 // pred_check
      _
    $region15: #{tpu_custom_call.1} parent=1 // pred_check_branch
      %48 = sbr.rel (0) target = $region17
    $region16: #{tpu_custom_call.1} parent=1 // pred_region
      %50 = vsyncadd [#allocation6], 0
      %s51 = sshll.u32 %s3, 4
      %s52 = int_to_ptr.hbm [resolvable:$true] %s51
      %s53 = sshll.u32 [#allocation7], 4
      %s54 = int_to_ptr.vmem [resolvable:$true] %s53
      %59 = dma.hbm_to_vmem [thread:$0]  %s52, 1024, %s54, [#allocation6], 64, 64, 4
    $region17: #{tpu_custom_call.1} parent=1 // pred_fallthru
      _
    // Predicated region
    $region18: #{tpu_custom_call.1} parent=1 // pred_check
      _
    $region19: #{tpu_custom_call.1} parent=1 // pred_check_branch
      %61 = sbr.rel (0) target = $region21
    $region20: #{tpu_custom_call.1} parent=1 // pred_region
      _
    $region21: #{tpu_custom_call.1} parent=1 // pred_fallthru
      _
    // Predicated region
    $region22: #{tpu_custom_call.1} parent=1 // pred_check
      _
    $region23: #{tpu_custom_call.1} parent=1 // pred_check_branch
      %63 = sbr.rel (0) target = $region25
    $region24: #{tpu_custom_call.1} parent=1 // pred_region
      %65 = vsyncadd [#allocation9], 0
      %s66 = sshll.u32 %s5, 4
      %s67 = int_to_ptr.hbm [resolvable:$true] %s66
      %s68 = sshll.u32 [#allocation8], 4
      %s69 = int_to_ptr.vmem [resolvable:$true] %s68
      %74 = dma.hbm_to_vmem [thread:$0]  %s67, 1024, %s69, [#allocation9], 64, 64, 4
    $region25: #{tpu_custom_call.1} parent=1 // pred_fallthru
      _
    // Predicated region
    $region26: #{tpu_custom_call.1} parent=1 // pred_check
      _
    $region27: #{tpu_custom_call.1} parent=1 // pred_check_branch
      %76 = sbr.rel (0) target = $region29
    $region28: #{tpu_custom_call.1} parent=1 // pred_region
      _
    $region29: #{tpu_custom_call.1} parent=1 // pred_fallthru
      _
    // Predicated region
    $region30: #{tpu_custom_call.1} parent=1 // pred_check
      _
    $region31: #{tpu_custom_call.1} parent=1 // pred_check_branch
      %78 = sbr.rel (0) target = $region33
    $region32: #{tpu_custom_call.1} parent=1 // pred_region
      %80 = vsyncadd [#allocation9], 0
      %s81 = sshll.u32 %s7, 4
      %s82 = int_to_ptr.hbm [resolvable:$true] %s81
      %s83 = sshll.u32 [#allocation10], 4
      %s84 = int_to_ptr.vmem [resolvable:$true] %s83
      %89 = dma.hbm_to_vmem [thread:$0]  %s82, 1024, %s84, [#allocation9], 64, 64, 4
    $region33: #{tpu_custom_call.1} parent=1 // pred_fallthru
      _
    // Predicated region
    $region34: #{tpu_custom_call.1} parent=1 // pred_check
      _
    $region35: #{tpu_custom_call.1} parent=1 // pred_check_branch
      %91 = sbr.rel (0) target = $region37
    $region36: #{tpu_custom_call.1} parent=1 // pred_region
      _
    $region37: #{tpu_custom_call.1} parent=1 // pred_fallthru
      _
    // Predicated region
    $region38: #{tpu_custom_call.1} parent=1 // pred_check
      _
    $region39: #{tpu_custom_call.1} parent=1 // pred_check_branch
      %93 = sbr.rel (0) target = $region41
    $region40: #{tpu_custom_call.1} parent=1 // pred_region
      %95 = vsyncadd [#allocation12], 0
      %s96 = sshll.u32 %s9, 4
      %s97 = int_to_ptr.hbm [resolvable:$true] %s96
      %s98 = sshll.u32 [#allocation11], 4
      %s99 = int_to_ptr.vmem [resolvable:$true] %s98
      %104 = dma.hbm_to_vmem [thread:$0]  %s97, 1024, %s99, [#allocation12], 64, 64, 4
    $region41: #{tpu_custom_call.1} parent=1 // pred_fallthru
      _
    // Predicated region
    $region42: #{tpu_custom_call.1} parent=1 // pred_check
      _
    $region43: #{tpu_custom_call.1} parent=1 // pred_check_branch
      %106 = sbr.rel (0) target = $region45
    $region44: #{tpu_custom_call.1} parent=1 // pred_region
      _
    $region45: #{tpu_custom_call.1} parent=1 // pred_fallthru
      _
    // Predicated region
    $region46: #{tpu_custom_call.1} parent=1 // pred_check
      _
    $region47: #{tpu_custom_call.1} parent=1 // pred_check_branch
      %108 = sbr.rel (0) target = $region49
    $region48: #{tpu_custom_call.1} parent=1 // pred_region
      %110 = dma.done [#allocation3], 128
    $region49: #{tpu_custom_call.1} parent=1 // pred_fallthru
      _
    // Predicated region
    $region50: #{tpu_custom_call.1} parent=1 // pred_check
      _
    $region51: #{tpu_custom_call.1} parent=1 // pred_check_branch
      %112 = sbr.rel (0) target = $region53
    $region52: #{tpu_custom_call.1} parent=1 // pred_region
      %114 = dma.done [#allocation6], 512
    $region53: #{tpu_custom_call.1} parent=1 // pred_fallthru
      _
    // Predicated region
    $region54: #{tpu_custom_call.1} parent=1 // pred_check
      _
    $region55: #{tpu_custom_call.1} parent=1 // pred_check_branch
      %116 = sbr.rel (0) target = $region57
    $region56: #{tpu_custom_call.1} parent=1 // pred_region
      %118 = dma.done [#allocation6], 1024
    $region57: #{tpu_custom_call.1} parent=1 // pred_fallthru
      _
    // Predicated region
    $region58: #{tpu_custom_call.1} parent=1 // pred_check
      _
    $region59: #{tpu_custom_call.1} parent=1 // pred_check_branch
      %120 = sbr.rel (0) target = $region61
    $region60: #{tpu_custom_call.1} parent=1 // pred_region
      %122 = dma.done [#allocation9], 1024
    $region61: #{tpu_custom_call.1} parent=1 // pred_fallthru
      _
    // Predicated region
    $region62: #{tpu_custom_call.1} parent=1 // pred_check
      _
    $region63: #{tpu_custom_call.1} parent=1 // pred_check_branch
      %124 = sbr.rel (0) target = $region65
    $region64: #{tpu_custom_call.1} parent=1 // pred_region
      %126 = dma.done [#allocation9], 1024
    $region65: #{tpu_custom_call.1} parent=1 // pred_fallthru
      _
    // Predicated region
    $region66: #{tpu_custom_call.1} parent=1 // pred_check
      _
    $region67: #{tpu_custom_call.1} parent=1 // pred_check_branch
      %128 = sbr.rel (0) target = $region69
    $region68: #{tpu_custom_call.1} parent=1 // pred_region
      %130 = dma.done [#allocation12], 1024
    $region69: #{tpu_custom_call.1} parent=1 // pred_fallthru
      _
    %v132 = vld [vmem:[#allocation2] sm:$0xff]
    %v133 = vpack.c.bf16 %v132, %v132
    %v134 = vld [vmem:[#allocation5] sm:$0xf]
    %v135 = vld [vmem:[#allocation5 + $0x4] sm:$0xf]
    %v136 = vld [vmem:[#allocation5 + $0x8] sm:$0xf]
    %v137 = vld [vmem:[#allocation5 + $0xc] sm:$0xf]
    %v138 = vld [vmem:[#allocation5 + $0x10] sm:$0xf]
    %v139 = vld [vmem:[#allocation5 + $0x14] sm:$0xf]
    %v140 = vld [vmem:[#allocation5 + $0x18] sm:$0xf]
    %v141 = vld [vmem:[#allocation5 + $0x1c] sm:$0xf]
    %v142 = vld [vmem:[%s2] sm:$0x1]
    %v144 = vperm.slane %v142, 0
    %v154 = vunpack.c.l.b16 %v134
    %v155 = vunpack.c.l.b16 %v135
    %v156 = vunpack.c.l.b16 %v136
    %v157 = vunpack.c.l.b16 %v137
    %v158 = vunpack.c.l.b16 %v138
    %v159 = vunpack.c.l.b16 %v139
    %v160 = vunpack.c.l.b16 %v140
    %v161 = vunpack.c.l.b16 %v141
    %v162 = vpack.c.b16 %v155, %v154
    %v163 = vpack.c.b16 %v157, %v156
    %v164 = vpack.c.b16 %v159, %v158
    %v165 = vpack.c.b16 %v161, %v160
    %vm170 = vcmask 523264
    %v172 = vsel %vm170, %v133, 0
    %174 = vmatpush.bf16.msra.mxu0 0
    %175 = vmatpush.bf16.msra.mxu0 0
    %176 = vmatpush.bf16.msra.mxu0 0
    %177 = vmatpush.bf16.msra.mxu0 0
    %178 = vmatpush.bf16.msra.mxu0 %v165
    %179 = vmatpush.bf16.msra.mxu0 %v164
    %180 = vmatpush.bf16.msra.mxu0 %v163
    %181 = vmatpush.bf16.msra.mxu0 %v162
    %182 = vmatmul.bf16.gmra.mxu0 %v172
    %v183 = vpop.f32.mrf.mxu0
    %v184 = vadd.f32 %v144, %v183
    %v185 = vpop.f32.mrf.mxu0
    %186 = vdwg.mxu0
    %v187 = vmax.f32 %v184, 0.0
    %v188 = vpack.c.bf16 %v187, %v187
    %v189 = vld [vmem:[#allocation7] sm:$0xf]
    %v190 = vld [vmem:[#allocation7 + $0x4] sm:$0xf]
    %v191 = vld [vmem:[#allocation7 + $0x8] sm:$0xf]
    %v192 = vld [vmem:[#allocation7 + $0xc] sm:$0xf]
    %v193 = vld [vmem:[#allocation7 + $0x10] sm:$0xf]
    %v194 = vld [vmem:[#allocation7 + $0x14] sm:$0xf]
    %v195 = vld [vmem:[#allocation7 + $0x18] sm:$0xf]
    %v196 = vld [vmem:[#allocation7 + $0x1c] sm:$0xf]
    %v197 = vld [vmem:[#allocation7 + $0x20] sm:$0xf]
    %v198 = vld [vmem:[#allocation7 + $0x24] sm:$0xf]
    %v199 = vld [vmem:[#allocation7 + $0x28] sm:$0xf]
    %v200 = vld [vmem:[#allocation7 + $0x2c] sm:$0xf]
    %v201 = vld [vmem:[#allocation7 + $0x30] sm:$0xf]
    %v202 = vld [vmem:[#allocation7 + $0x34] sm:$0xf]
    %v203 = vld [vmem:[#allocation7 + $0x38] sm:$0xf]
    %v204 = vld [vmem:[#allocation7 + $0x3c] sm:$0xf]
    %v205 = vld [vmem:[%s4] sm:$0x1]
    %v207 = vperm.slane %v205, 0
    %v225 = vunpack.c.l.b16 %v189
    %v226 = vunpack.c.l.b16 %v190
    %v227 = vunpack.c.l.b16 %v191
    %v228 = vunpack.c.l.b16 %v192
    %v229 = vunpack.c.l.b16 %v193
    %v230 = vunpack.c.l.b16 %v194
    %v231 = vunpack.c.l.b16 %v195
    %v232 = vunpack.c.l.b16 %v196
    %v233 = vunpack.c.l.b16 %v197
    %v234 = vunpack.c.l.b16 %v198
    %v235 = vunpack.c.l.b16 %v199
    %v236 = vunpack.c.l.b16 %v200
    %v237 = vunpack.c.l.b16 %v201
    %v238 = vunpack.c.l.b16 %v202
    %v239 = vunpack.c.l.b16 %v203
    %v240 = vunpack.c.l.b16 %v204
    %v241 = vpack.c.b16 %v226, %v225
    %v242 = vpack.c.b16 %v228, %v227
    %v243 = vpack.c.b16 %v230, %v229
    %v244 = vpack.c.b16 %v232, %v231
    %v245 = vpack.c.b16 %v234, %v233
    %v246 = vpack.c.b16 %v236, %v235
    %v247 = vpack.c.b16 %v238, %v237
    %v248 = vpack.c.b16 %v240, %v239
    %257 = vmatpush.bf16.msra.mxu0 %v248
    %258 = vmatpush.bf16.msra.mxu0 %v247
    %259 = vmatpush.bf16.msra.mxu0 %v246
    %260 = vmatpush.bf16.msra.mxu0 %v245
    %261 = vmatpush.bf16.msra.mxu0 %v244
    %262 = vmatpush.bf16.msra.mxu0 %v243
    %263 = vmatpush.bf16.msra.mxu0 %v242
    %264 = vmatpush.bf16.msra.mxu0 %v241
    %265 = vmatmul.bf16.gmra.mxu0 %v188
    %v266 = vpop.f32.mrf.mxu0
    %v267 = vadd.f32 %v207, %v266
    %v268 = vpop.f32.mrf.mxu0
    %269 = vdwg.mxu0
    %v270 = vmax.f32 %v267, 0.0
    %v271 = vpack.c.bf16 %v270, %v270
    %v272 = vld [vmem:[#allocation8] sm:$0xf]
    %v273 = vld [vmem:[#allocation8 + $0x4] sm:$0xf]
    %v274 = vld [vmem:[#allocation8 + $0x8] sm:$0xf]
    %v275 = vld [vmem:[#allocation8 + $0xc] sm:$0xf]
    %v276 = vld [vmem:[#allocation8 + $0x10] sm:$0xf]
    %v277 = vld [vmem:[#allocation8 + $0x14] sm:$0xf]
    %v278 = vld [vmem:[#allocation8 + $0x18] sm:$0xf]
    %v279 = vld [vmem:[#allocation8 + $0x1c] sm:$0xf]
    %v280 = vld [vmem:[#allocation8 + $0x20] sm:$0xf]
    %v281 = vld [vmem:[#allocation8 + $0x24] sm:$0xf]
    %v282 = vld [vmem:[#allocation8 + $0x28] sm:$0xf]
    %v283 = vld [vmem:[#allocation8 + $0x2c] sm:$0xf]
    %v284 = vld [vmem:[#allocation8 + $0x30] sm:$0xf]
    %v285 = vld [vmem:[#allocation8 + $0x34] sm:$0xf]
    %v286 = vld [vmem:[#allocation8 + $0x38] sm:$0xf]
    %v287 = vld [vmem:[#allocation8 + $0x3c] sm:$0xf]
    %v288 = vld [vmem:[%s6] sm:$0x1]
    %v290 = vperm.slane %v288, 0
    %v308 = vunpack.c.l.b16 %v272
    %v309 = vunpack.c.l.b16 %v273
    %v310 = vunpack.c.l.b16 %v274
    %v311 = vunpack.c.l.b16 %v275
    %v312 = vunpack.c.l.b16 %v276
    %v313 = vunpack.c.l.b16 %v277
    %v314 = vunpack.c.l.b16 %v278
    %v315 = vunpack.c.l.b16 %v279
    %v316 = vunpack.c.l.b16 %v280
    %v317 = vunpack.c.l.b16 %v281
    %v318 = vunpack.c.l.b16 %v282
    %v319 = vunpack.c.l.b16 %v283
    %v320 = vunpack.c.l.b16 %v284
    %v321 = vunpack.c.l.b16 %v285
    %v322 = vunpack.c.l.b16 %v286
    %v323 = vunpack.c.l.b16 %v287
    %v324 = vpack.c.b16 %v309, %v308
    %v325 = vpack.c.b16 %v311, %v310
    %v326 = vpack.c.b16 %v313, %v312
    %v327 = vpack.c.b16 %v315, %v314
    %v328 = vpack.c.b16 %v317, %v316
    %v329 = vpack.c.b16 %v319, %v318
    %v330 = vpack.c.b16 %v321, %v320
    %v331 = vpack.c.b16 %v323, %v322
    %340 = vmatpush.bf16.msra.mxu0 %v331
    %341 = vmatpush.bf16.msra.mxu0 %v330
    %342 = vmatpush.bf16.msra.mxu0 %v329
    %343 = vmatpush.bf16.msra.mxu0 %v328
    %344 = vmatpush.bf16.msra.mxu0 %v327
    %345 = vmatpush.bf16.msra.mxu0 %v326
    %346 = vmatpush.bf16.msra.mxu0 %v325
    %347 = vmatpush.bf16.msra.mxu0 %v324
    %348 = vmatmul.bf16.gmra.mxu0 %v271
    %v349 = vpop.f32.mrf.mxu0
    %v350 = vadd.f32 %v290, %v349
    %v351 = vpop.f32.mrf.mxu0
    %352 = vdwg.mxu0
    %v353 = vmax.f32 %v350, 0.0
    %v354 = vpack.c.bf16 %v353, %v353
    %v355 = vld [vmem:[#allocation10] sm:$0xf]
    %v356 = vld [vmem:[#allocation10 + $0x4] sm:$0xf]
    %v357 = vld [vmem:[#allocation10 + $0x8] sm:$0xf]
    %v358 = vld [vmem:[#allocation10 + $0xc] sm:$0xf]
    %v359 = vld [vmem:[#allocation10 + $0x10] sm:$0xf]
    %v360 = vld [vmem:[#allocation10 + $0x14] sm:$0xf]
    %v361 = vld [vmem:[#allocation10 + $0x18] sm:$0xf]
    %v362 = vld [vmem:[#allocation10 + $0x1c] sm:$0xf]
    %v363 = vld [vmem:[#allocation10 + $0x20] sm:$0xf]
    %v364 = vld [vmem:[#allocation10 + $0x24] sm:$0xf]
    %v365 = vld [vmem:[#allocation10 + $0x28] sm:$0xf]
    %v366 = vld [vmem:[#allocation10 + $0x2c] sm:$0xf]
    %v367 = vld [vmem:[#allocation10 + $0x30] sm:$0xf]
    %v368 = vld [vmem:[#allocation10 + $0x34] sm:$0xf]
    %v369 = vld [vmem:[#allocation10 + $0x38] sm:$0xf]
    %v370 = vld [vmem:[#allocation10 + $0x3c] sm:$0xf]
    %v371 = vld [vmem:[%s8] sm:$0x1]
    %v373 = vperm.slane %v371, 0
    %v391 = vunpack.c.l.b16 %v355
    %v392 = vunpack.c.l.b16 %v356
    %v393 = vunpack.c.l.b16 %v357
    %v394 = vunpack.c.l.b16 %v358
    %v395 = vunpack.c.l.b16 %v359
    %v396 = vunpack.c.l.b16 %v360
    %v397 = vunpack.c.l.b16 %v361
    %v398 = vunpack.c.l.b16 %v362
    %v399 = vunpack.c.l.b16 %v363
    %v400 = vunpack.c.l.b16 %v364
    %v401 = vunpack.c.l.b16 %v365
    %v402 = vunpack.c.l.b16 %v366
    %v403 = vunpack.c.l.b16 %v367
    %v404 = vunpack.c.l.b16 %v368
    %v405 = vunpack.c.l.b16 %v369
    %v406 = vunpack.c.l.b16 %v370
    %v407 = vpack.c.b16 %v392, %v391
    %v408 = vpack.c.b16 %v394, %v393
    %v409 = vpack.c.b16 %v396, %v395
    %v410 = vpack.c.b16 %v398, %v397
    %v411 = vpack.c.b16 %v400, %v399
    %v412 = vpack.c.b16 %v402, %v401
    %v413 = vpack.c.b16 %v404, %v403
    %v414 = vpack.c.b16 %v406, %v405
    %423 = vmatpush.bf16.msra.mxu0 %v414
    %424 = vmatpush.bf16.msra.mxu0 %v413
    %425 = vmatpush.bf16.msra.mxu0 %v412
    %426 = vmatpush.bf16.msra.mxu0 %v411
    %427 = vmatpush.bf16.msra.mxu0 %v410
    %428 = vmatpush.bf16.msra.mxu0 %v409
    %429 = vmatpush.bf16.msra.mxu0 %v408
    %430 = vmatpush.bf16.msra.mxu0 %v407
    %431 = vmatmul.bf16.gmra.mxu0 %v354
    %v432 = vpop.f32.mrf.mxu0
    %v433 = vadd.f32 %v373, %v432
    %v434 = vpop.f32.mrf.mxu0
    %435 = vdwg.mxu0
    %v436 = vmax.f32 %v433, 0.0
    %v437 = vpack.c.bf16 %v436, %v436
    %v438 = vld [vmem:[#allocation11] sm:$0xf]
    %v439 = vld [vmem:[#allocation11 + $0x4] sm:$0xf]
    %v440 = vld [vmem:[#allocation11 + $0x8] sm:$0xf]
    %v441 = vld [vmem:[#allocation11 + $0xc] sm:$0xf]
    %v442 = vld [vmem:[#allocation11 + $0x10] sm:$0xf]
    %v443 = vld [vmem:[#allocation11 + $0x14] sm:$0xf]
    %v444 = vld [vmem:[#allocation11 + $0x18] sm:$0xf]
    %v445 = vld [vmem:[#allocation11 + $0x1c] sm:$0xf]
    %v446 = vld [vmem:[#allocation11 + $0x20] sm:$0xf]
    %v447 = vld [vmem:[#allocation11 + $0x24] sm:$0xf]
    %v448 = vld [vmem:[#allocation11 + $0x28] sm:$0xf]
    %v449 = vld [vmem:[#allocation11 + $0x2c] sm:$0xf]
    %v450 = vld [vmem:[#allocation11 + $0x30] sm:$0xf]
    %v451 = vld [vmem:[#allocation11 + $0x34] sm:$0xf]
    %v452 = vld [vmem:[#allocation11 + $0x38] sm:$0xf]
    %v453 = vld [vmem:[#allocation11 + $0x3c] sm:$0xf]
    %v454 = vld [vmem:[%s10] sm:$0x1]
    %v456 = vperm.slane %v454, 0
    %v474 = vunpack.c.l.b16 %v438
    %v475 = vunpack.c.l.b16 %v439
    %v476 = vunpack.c.l.b16 %v440
    %v477 = vunpack.c.l.b16 %v441
    %v478 = vunpack.c.l.b16 %v442
    %v479 = vunpack.c.l.b16 %v443
    %v480 = vunpack.c.l.b16 %v444
    %v481 = vunpack.c.l.b16 %v445
    %v482 = vunpack.c.l.b16 %v446
    %v483 = vunpack.c.l.b16 %v447
    %v484 = vunpack.c.l.b16 %v448
    %v485 = vunpack.c.l.b16 %v449
    %v486 = vunpack.c.l.b16 %v450
    %v487 = vunpack.c.l.b16 %v451
    %v488 = vunpack.c.l.b16 %v452
    %v489 = vunpack.c.l.b16 %v453
    %v490 = vpack.c.b16 %v475, %v474
    %v491 = vpack.c.b16 %v477, %v476
    %v492 = vpack.c.b16 %v479, %v478
    %v493 = vpack.c.b16 %v481, %v480
    %v494 = vpack.c.b16 %v483, %v482
    %v495 = vpack.c.b16 %v485, %v484
    %v496 = vpack.c.b16 %v487, %v486
    %v497 = vpack.c.b16 %v489, %v488
    %506 = vmatpush.bf16.msra.mxu0 %v497
    %507 = vmatpush.bf16.msra.mxu0 %v496
    %508 = vmatpush.bf16.msra.mxu0 %v495
    %509 = vmatpush.bf16.msra.mxu0 %v494
    %510 = vmatpush.bf16.msra.mxu0 %v493
    %511 = vmatpush.bf16.msra.mxu0 %v492
    %512 = vmatpush.bf16.msra.mxu0 %v491
    %513 = vmatpush.bf16.msra.mxu0 %v490
    %514 = vmatmul.bf16.gmra.mxu0 %v437
    %v515 = vpop.f32.mrf.mxu0
    %v516 = vadd.f32 %v456, %v515
    %v517 = vpop.f32.mrf.mxu0
    %518 = vdwg.mxu0
    %519 = vst [vmem:[#allocation13] sm:$0xff] %v516
    // Predicated region
    $region70: #{tpu_custom_call.1} parent=1 // pred_check
      _
    $region71: #{tpu_custom_call.1} parent=1 // pred_check_branch
      %521 = sbr.rel (0) target = $region73
    $region72: #{tpu_custom_call.1} parent=1 // pred_region
      %523 = vsyncadd [#allocation4], 0
      %s525 = sshll.u32 [#allocation13], 4
      %s526 = int_to_ptr.vmem [resolvable:$true] %s525
      %s527 = sshll.u32 %s11, 4
      %s528 = int_to_ptr.hbm [resolvable:$true] %s527
      %530 = dma.vmem_to_hbm [thread:$0]  %s526, 128, %s528, [#allocation4]
    $region73: #{tpu_custom_call.1} parent=1 // pred_fallthru
      _
    // Predicated region
    $region74: #{tpu_custom_call.1} parent=1 // pred_check
      _
    $region75: #{tpu_custom_call.1} parent=1 // pred_check_branch
      %532 = sbr.rel (0) target = $region77
    $region76: #{tpu_custom_call.1} parent=1 // pred_region
      %534 = dma.done [#allocation4], 128
    $region77: #{tpu_custom_call.1} parent=1 // pred_fallthru
      _
    %535 = vsyncpa [#allocation3], 1
    %536 = vsyncpa [#allocation6], 1
    %537 = vsyncpa [#allocation9], 1
    %538 = vsyncpa [#allocation12], 1
    %539 = vsyncpa [#allocation4], 1

</llo_original>
